<compile_context>
chip_gen: v7x
topology: tpu7x:2x2x1
jax: 0.10.0
libtpu: 0.0.40
codegen_flags: <defaults>
</compile_context>

<pallas_src>
import math
import re

import jax
import jax.numpy as jnp
from jax.experimental import pallas as pl
from jax.experimental.pallas import tpu as pltpu


# Row layout of the packed per-feature constants block (shape (8, Dw)).
_ROW_MU = 0            # raw mu (used by denormalize multiply-add)
_ROW_MU_SAFE = 1       # nan_to_num(mu)
_ROW_SIGMA = 2
_ROW_INV_SIGMA = 3
_ROW_STABLE_NORM = 4   # 1.0 where (sigma > 0.01) & ~isnan(mu)
_ROW_STABLE_DENORM = 5 # 1.0 where (sigma > 0.01)
_CONST_ROWS = 8

_MIN_SPLIT_BYTES = 2 * 1024 * 1024   # below this a 1-step grid is fine


# ---------------------------------------------------------------------------
# Kernels (pure elementwise hot path; constants are (1, Dw) broadcasts)
# ---------------------------------------------------------------------------
def _normalize_kernel(x_ref, c_ref, o_ref):
    cdt = c_ref.dtype                                  # compute dtype (f32 / bf16)
    x = x_ref[...].astype(cdt)                         # (TR, Dw)
    mu_safe = c_ref[_ROW_MU_SAFE:_ROW_MU_SAFE + 1, :]  # (1, Dw)
    inv_sigma = c_ref[_ROW_INV_SIGMA:_ROW_INV_SIGMA + 1, :]
    stable = c_ref[_ROW_STABLE_NORM:_ROW_STABLE_NORM + 1, :] > 0.5
    # When mu is finite, mu_safe == mu so `centered` serves both branches; when
    # mu is NaN the stable mask is False and `centered` IS the reference
    # fallback (x - nan_to_num(mu)).
    centered = x - mu_safe
    normalized = jnp.clip(centered * inv_sigma, -1e4, 1e4)
    o_ref[...] = jnp.where(stable, normalized, centered).astype(o_ref.dtype)


def _denormalize_kernel(x_ref, c_ref, o_ref):
    cdt = c_ref.dtype
    x = x_ref[...].astype(cdt)
    mu = c_ref[_ROW_MU:_ROW_MU + 1, :]
    mu_safe = c_ref[_ROW_MU_SAFE:_ROW_MU_SAFE + 1, :]
    sigma = c_ref[_ROW_SIGMA:_ROW_SIGMA + 1, :]
    stable = c_ref[_ROW_STABLE_DENORM:_ROW_STABLE_DENORM + 1, :] > 0.5
    denorm = x * sigma + mu
    o_ref[...] = jnp.where(stable, denorm, x + mu_safe).astype(o_ref.dtype)


# ---------------------------------------------------------------------------
# Tiling helpers
# ---------------------------------------------------------------------------
def _tpu_generation():
    """Best-effort TPU generation from device_kind; 0 if unknown."""
    try:
        kind = jax.devices()[0].device_kind.lower()
        m = re.search(r"v(\d+)", kind)
        if m:
            return int(m.group(1))
    except Exception:
        pass
    return 0


def _choose_tile_rows(n_rows, lane_width, itemsize, align, target_block_bytes):
    """Largest aligned row tile near the block-byte target, never 1-step for
    mid-size inputs (pipelining + megacore sharding need multiple steps)."""
    row_bytes = max(1, lane_width * itemsize)
    total_bytes = n_rows * row_bytes
    rows = (target_block_bytes // row_bytes) // align * align
    rows = max(align, rows)
    if rows < n_rows:
        return rows
    # Whole array fits under the per-block target.
    if total_bytes <= _MIN_SPLIT_BYTES or n_rows <= 2 * align:
        return n_rows                    # tiny: single full-extent block is fine
    # Split into ~4 steps so software pipelining and the 'parallel' axis engage.
    rows = -(-n_rows // 4)               # cdiv(n_rows, 4)
    rows = ((rows + align - 1) // align) * align
    return min(max(align, rows), n_rows)


def _run_elementwise(kernel, x2d, consts, tile_rows, vmem_limit_bytes):
    R, Dw = x2d.shape
    grid = (pl.cdiv(R, tile_rows),)
    return pl.pallas_call(
        kernel,
        out_shape=jax.ShapeDtypeStruct((R, Dw), x2d.dtype),
        grid=grid,
        in_specs=[
            pl.BlockSpec((tile_rows, Dw), lambda i: (i, 0)),
            pl.BlockSpec((_CONST_ROWS, Dw), lambda i: (0, 0)),  # constant block
        ],
        out_specs=pl.BlockSpec((tile_rows, Dw), lambda i: (i, 0)),
        compiler_params=pltpu.CompilerParams(
            dimension_semantics=("parallel",),
            vmem_limit_bytes=vmem_limit_bytes,
        ),
    )(x2d, consts)


# ---------------------------------------------------------------------------
# Module wrapper
# ---------------------------------------------------------------------------
class InputNormPallas:
    """JAX/Pallas port of InputNorm's forward pass (normalize / denormalize).

    Buffers mu / nu / _t are held as arrays; stats updates are training-time
    bookkeeping outside forward().
    """

    def __init__(self, dim, beta=1e-4, init_nu=1.0, skip=False):
        self.skip = skip
        self.beta = beta
        self.dim = dim
        self.mu = jnp.zeros((dim,), jnp.float32)
        self.nu = jnp.ones((dim,), jnp.float32) * init_nu
        self._t = jnp.ones((1,), jnp.float32)
        # TODO(synk): update_stats / masked_stats (moving-average buffer updates
        # with MAGIC_PAD_VAL masking) are not part of forward() and are not
        # kernelized here.

    # ---- per-feature stats, computed once on tiny [D] vectors --------------
    def _const_rows(self, k, compute_dtype):
        mu = self.mu.astype(jnp.float32)
        nu = self.nu.astype(jnp.float32)
        sigma = jnp.clip(jnp.nan_to_num(jnp.sqrt(nu - mu * mu + 1e-5)), 1e-3, 1e6)
        inv_sigma = 1.0 / sigma
        mu_safe = jnp.nan_to_num(mu)
        stable_n = jnp.logical_and(sigma > 0.01,
                                   jnp.logical_not(jnp.isnan(mu))).astype(jnp.float32)
        stable_d = (sigma > 0.01).astype(jnp.float32)
        zeros = jnp.zeros_like(mu)
        rows = jnp.stack(
            [mu, mu_safe, sigma, inv_sigma, stable_n, stable_d, zeros, zeros],
            axis=0,
        )                                        # (8, D)
        if k > 1:
            rows = jnp.tile(rows, (1, k))        # (8, k*D), matches lane folding
        return rows.astype(compute_dtype)

    def __call__(self, x, denormalize=False, tile_rows=None):
        if self.skip:
            return x
        orig_shape = x.shape
        D = orig_shape[-1]
        assert D == self.dim
        x2d = x.reshape(-1, D)                   # native dtype, no wrapper cast
        R = x2d.shape[0]

        gen = _tpu_generation()

        # Generalized lane folding: fold k rows so the lane width is a multiple
        # of 128 (lane-dense, unmasked stores).  Pad R up to a multiple of k
        # rather than silently dropping back to masked narrow stores.
        k = 1
        if D % 128 != 0:
            k = 128 // math.gcd(D, 128)
            if k > 32:                           # pathological D; fold not worth it
                k = 1
        pad_rows = (-R) % k if k > 1 else 0
        if pad_rows:
            x2d = jnp.pad(x2d, ((0, pad_rows), (0, 0)))
        R_pad = R + pad_rows
        if k > 1:
            x2d = x2d.reshape(R_pad // k, k * D)  # free row-major reshape
        R_fold, Dw = x2d.shape

        # Compute dtype: bf16 math on v6e/v7x (native bf16 VPU); f32 otherwise.
        if x.dtype == jnp.bfloat16 and gen >= 6:
            compute_dtype = jnp.bfloat16
        else:
            compute_dtype = jnp.float32
        consts = self._const_rows(k, compute_dtype)

        # Tile sizing: ~4 MiB blocks (6 MiB on v7x where the fixed per-step cost
        # is a larger fraction of the faster HBM stream).
        itemsize = x2d.dtype.itemsize
        align = max(8, 32 // max(1, itemsize))   # 8 (f32) / 16 (bf16) / 32 (i8)
        target_block_bytes = (6 if gen >= 7 else 4) * 1024 * 1024
        if tile_rows is None:
            tr = _choose_tile_rows(R_fold, Dw, itemsize, align, target_block_bytes)
        else:
            tr = min(int(tile_rows), R_fold)
            if tr < R_fold:
                tr = min(max(align, (tr + align - 1) // align * align), R_fold)

        block_bytes = tr * Dw * itemsize
        vmem_limit = int(min(48 * 1024 * 1024,
                             max(32 * 1024 * 1024, 4 * block_bytes + 2 * 1024 * 1024)))

        kernel = _denormalize_kernel if denormalize else _normalize_kernel
        out2d = _run_elementwise(kernel, x2d, consts, tr, vmem_limit)

        if k > 1:
            out2d = out2d.reshape(R_pad, D)
        if pad_rows:
            out2d = out2d[:R]
        return out2d.reshape(orig_shape)


# ---------------------------------------------------------------------------
# Pure-JAX reference (mirrors the PyTorch code)
# ---------------------------------------------------------------------------
def _ref_sigma(mu, nu):
    return jnp.clip(jnp.nan_to_num(jnp.sqrt(nu - mu**2 + 1e-5)), 1e-3, 1e6)


def _reference_normalize(x, mu, nu):
    sigma = _ref_sigma(mu, nu)
    normalized = jnp.clip((x - mu) / sigma, -1e4, 1e4)
    use_norm = jnp.logical_and(
        jnp.broadcast_to(sigma > 0.01, normalized.shape),
        ~jnp.isnan(normalized),
    )
    return jnp.where(use_norm, normalized, x - jnp.nan_to_num(mu))


def _reference_denormalize(x, mu, nu):
    sigma = _ref_sigma(mu, nu)
    denorm = x * sigma + mu
    stable = jnp.broadcast_to(sigma > 0.01, denorm.shape)
    return jnp.where(stable, denorm, x + jnp.nan_to_num(mu))


if __name__ == "__main__":
    key = jax.random.PRNGKey(0)
    k0, k1, k2, k3, k4 = jax.random.split(key, 5)

    B, T, D = 2, 8, 32
    x = jax.random.normal(k0, (B, T, D), dtype=jnp.float32) * 3.0 + 0.5

    norm = InputNormPallas(dim=D, beta=1e-4, init_nu=1.0, skip=False)
    # Non-trivial stats so both the stable and unstable branches are exercised.
    mu = jax.random.normal(k1, (D,), jnp.float32)
    var = jnp.abs(jax.random.normal(k2, (D,), jnp.float32)) * 2.0
    var = var.at[:4].set(1e-6)            # a few "unstable" features (sigma <= 0.01)
    norm.mu = mu
    norm.nu = mu**2 + var

    # normalize path (default forward) — lane-folded (D=32 -> 128 lanes)
    y = jax.block_until_ready(norm(x, denormalize=False))
    # denormalize path
    z = jax.block_until_ready(norm(x, denormalize=True))

    y_ref = _reference_normalize(x, norm.mu, norm.nu)
    z_ref = _reference_denormalize(x, norm.mu, norm.nu)
    assert y.shape == x.shape and y.dtype == x.dtype
    assert jnp.allclose(y, y_ref, atol=1e-5, rtol=1e-5)
    assert jnp.allclose(z, z_ref, atol=1e-5, rtol=1e-5)

    # Multi-step grid with a partial boundary block AND a row pad
    # (R = 51 not divisible by the fold factor k = 4).
    x_odd = jax.random.normal(k1, (3, 17, D), dtype=jnp.float32) * 2.0
    y_odd = jax.block_until_ready(norm(x_odd, denormalize=False, tile_rows=8))
    y_odd_ref = _reference_normalize(x_odd, norm.mu, norm.nu)
    assert y_odd.shape == x_odd.shape
    assert jnp.allclose(y_odd, y_odd_ref, atol=1e-5, rtol=1e-5)

    # Native-dtype (bf16) I/O path: bf16 math on v6e/v7x, f32 math on v5e.
    xb = x.astype(jnp.bfloat16)
    yb = jax.block_until_ready(norm(xb, denormalize=False))
    assert yb.dtype == jnp.bfloat16 and yb.shape == x.shape
    yb_ref = _reference_normalize(xb.astype(jnp.float32), norm.mu, norm.nu)
    assert jnp.allclose(yb.astype(jnp.float32), yb_ref, atol=5e-1, rtol=5e-2)

    # Generalized fold: D = 48 (not a power-of-two divisor of 128) -> k = 8,
    # Dw = 384, with a row pad (R = 18 not divisible by 8).
    D2 = 48
    norm48 = InputNormPallas(dim=D2, skip=False)
    mu2 = jax.random.normal(k3, (D2,), jnp.float32) * 0.5
    var2 = jnp.abs(jax.random.normal(k4, (D2,), jnp.float32)) + 0.5
    norm48.mu = mu2
    norm48.nu = mu2**2 + var2
    x48 = jax.random.normal(k3, (2, 9, D2), dtype=jnp.float32) * 2.0
    y48 = jax.block_until_ready(norm48(x48, denormalize=False))
    z48 = jax.block_until_ready(norm48(x48, denormalize=True))
    assert jnp.allclose(y48, _reference_normalize(x48, mu2, norm48.nu), atol=1e-5, rtol=1e-5)
    assert jnp.allclose(z48, _reference_denormalize(x48, mu2, norm48.nu), atol=1e-5, rtol=1e-5)

    print("KERNEL_OK")
</pallas_src>

<mosaic_0001>
module attributes {stable_mosaic.version = 11 : i64} {
  func.func @_normalize_kernel(%arg0: i32, %arg1: memref<4x128xf32, #tpu.memory_space<vmem>>, %arg2: memref<8x128xf32, #tpu.memory_space<vmem>>, %arg3: memref<4x128xf32, #tpu.memory_space<vmem>>) attributes {dimension_semantics = [#tpu.dimension_semantics<parallel>], iteration_bounds = array<i64: 1>, scalar_prefetch = 0 : i64, scratch_operands = 0 : i64, tpu.core_type = #tpu.core_type<tc>, window_params = [{transform_indices = @transform_0, window_bounds = array<i64: 4, 128>}, {pipeline_mode = #tpu.pipeline_mode<synchronous>, transform_indices = @transform_1, window_bounds = array<i64: 8, 128>}, {transform_indices = @transform_2, window_bounds = array<i64: 4, 128>}]} {
    %c0 = arith.constant 0 : index
    %c0_0 = arith.constant 0 : index
    %0 = vector.load %arg1[%c0, %c0_0] : memref<4x128xf32, #tpu.memory_space<vmem>>, vector<4x128xf32>
    %c1 = arith.constant 1 : index
    %c0_1 = arith.constant 0 : index
    %1 = vector.load %arg2[%c1, %c0_1] : memref<8x128xf32, #tpu.memory_space<vmem>>, vector<1x128xf32>
    %c3 = arith.constant 3 : index
    %c0_2 = arith.constant 0 : index
    %2 = vector.load %arg2[%c3, %c0_2] : memref<8x128xf32, #tpu.memory_space<vmem>>, vector<1x128xf32>
    %c4 = arith.constant 4 : index
    %c0_3 = arith.constant 0 : index
    %3 = vector.load %arg2[%c4, %c0_3] : memref<8x128xf32, #tpu.memory_space<vmem>>, vector<1x128xf32>
    %cst = arith.constant 5.000000e-01 : f32
    %4 = vector.broadcast %cst : f32 to vector<1x128xf32>
    %5 = arith.cmpf ogt, %3, %4 : vector<1x128xf32>
    %6 = vector.broadcast %1 : vector<1x128xf32> to vector<4x128xf32>
    %7 = arith.subf %0, %6 : vector<4x128xf32>
    %8 = vector.broadcast %2 : vector<1x128xf32> to vector<4x128xf32>
    %9 = arith.mulf %7, %8 : vector<4x128xf32>
    %cst_4 = arith.constant -1.000000e+04 : f32
    %cst_5 = arith.constant 1.000000e+04 : f32
    %10 = vector.broadcast %cst_4 : f32 to vector<4x128xf32>
    %11 = arith.maximumf %10, %9 : vector<4x128xf32>
    %12 = vector.broadcast %cst_5 : f32 to vector<4x128xf32>
    %13 = arith.minimumf %12, %11 : vector<4x128xf32>
    %14 = vector.shape_cast %5 : vector<1x128xi1> to vector<1x128xi1>
    %15 = vector.broadcast %14 : vector<1x128xi1> to vector<4x128xi1>
    %16 = arith.select %15, %13, %7 : vector<4x128xi1>, vector<4x128xf32>
    %c0_6 = arith.constant 0 : index
    %c0_7 = arith.constant 0 : index
    %17 = vector.load %arg3[%c0_6, %c0_7] : memref<4x128xf32, #tpu.memory_space<vmem>>, vector<4x128xf32>
    tpu.vector_store %arg3[%c0_6, %c0_7], %16 {strides = array<i32>} : memref<4x128xf32, #tpu.memory_space<vmem>>, vector<4x128xf32>,
    return
  }
  func.func @transform_0(%arg0: i32) -> (i32, i32) {
    %c0_i32 = arith.constant 0 : i32
    %c0_i32_0 = arith.constant 0 : i32
    return %arg0, %c0_i32 : i32, i32
  }
  func.func @transform_1(%arg0: i32) -> (i32, i32) {
    %c0_i32 = arith.constant 0 : i32
    %c0_i32_0 = arith.constant 0 : i32
    %c0_i32_1 = arith.constant 0 : i32
    return %c0_i32, %c0_i32_0 : i32, i32
  }
  func.func @transform_2(%arg0: i32) -> (i32, i32) {
    %c0_i32 = arith.constant 0 : i32
    %c0_i32_0 = arith.constant 0 : i32
    return %arg0, %c0_i32 : i32, i32
  }
}

</mosaic_0001>

<llo_original>
// kernel: tpu_custom_call.1
$region0: #{tpu_custom_call.1}
  #allocation0 [shape = 'u32[]', space=smem, size = 0x4, offset = 0x4, fixed_abs, tag = 'smem constant byte address 0x4 - core index']
  #allocation1 [shape = 'u32[144,128]{1,0:T(1,128)}', space=vmem, size = 0x12000, scoped, tag = 'internal scratch']
  %s0 = inlined_call_operand.hbm [shape: f32[4,128], index: 0, kind: input, shape index: {}]
  %s1 = inlined_call_operand.hbm [shape: f32[8,128], index: 1, kind: input, shape index: {}]
  %s2 = inlined_call_operand.hbm [shape: f32[4,128], index: 2, kind: output, shape index: {}]
  %s3 = sld [smem:[#allocation0]]
  $region26: #{tpu_custom_call.1} parent=0
    _
  %s5 = ssub.s32 1, %s3
  %s6 = scalar_select 0, %s5, %s3
  $region1: #{tpu_custom_call.1} parent=0
    #allocation2 [shape = 'u8[2048]{0}', space=vmem, size = 0x800, scoped, tag = 'input window, operand 0, single buffered']
    #allocation3 [shape = 's32[1]{0}', space=sflag, size = 0x4, scoped, tag = 'scoped memory for tpu_custom_call.1']
    #allocation4 [shape = 's32[1]{0}', space=sflag, size = 0x4, scoped, tag = 'scoped memory for tpu_custom_call.1']
    #allocation5 [shape = 'u8[4096]{0}', space=vmem, size = 0x1000, scoped, tag = 'input window, operand 1, single buffered']
    #allocation6 [shape = 's32[1]{0}', space=sflag, size = 0x4, scoped, tag = 'scoped memory for tpu_custom_call.1']
    #allocation7 [shape = 'u8[2048]{0}', space=vmem, size = 0x800, scoped, tag = 'output window, operand 0, single buffered']
    %7 = vsyncpa [#allocation3], 0
    %8 = vsyncpa [#allocation6], 0
    %9 = vsyncpa [#allocation4], 0
    // Predicated region
    $region2: #{tpu_custom_call.1} parent=1 // pred_check
      _
    $region3: #{tpu_custom_call.1} parent=1 // pred_check_branch
      %11 = sbr.rel (0) target = $region5
    $region4: #{tpu_custom_call.1} parent=1 // pred_region
      %s13 = ssub.s32 64, 64
      %14 = vsyncadd [#allocation3], %s13
      %s16 = sshll.u32 [#allocation2], 4
      %s17 = int_to_ptr.vmem [resolvable:$true] %s16
      %19 = dma.hbm_to_vmem [thread:$0]  %s0, 64, %s17, [#allocation3]
    $region5: #{tpu_custom_call.1} parent=1 // pred_fallthru
      _
    // Predicated region
    $region6: #{tpu_custom_call.1} parent=1 // pred_check
      _
    $region7: #{tpu_custom_call.1} parent=1 // pred_check_branch
      %21 = sbr.rel (0) target = $region9
    $region8: #{tpu_custom_call.1} parent=1 // pred_region
      %s23 = ssub.s32 128, 128
      %24 = vsyncadd [#allocation6], %s23
      %s26 = sshll.u32 [#allocation5], 4
      %s27 = int_to_ptr.vmem [resolvable:$true] %s26
      %29 = dma.hbm_to_vmem [thread:$0]  %s1, 128, %s27, [#allocation6]
    $region9: #{tpu_custom_call.1} parent=1 // pred_fallthru
      _
    // Predicated region
    $region10: #{tpu_custom_call.1} parent=1 // pred_check
      _
    $region11: #{tpu_custom_call.1} parent=1 // pred_check_branch
      %31 = sbr.rel (0) target = $region13
    $region12: #{tpu_custom_call.1} parent=1 // pred_region
      %32 = dma.done [#allocation3], 64
    $region13: #{tpu_custom_call.1} parent=1 // pred_fallthru
      _
    // Predicated region
    $region14: #{tpu_custom_call.1} parent=1 // pred_check
      _
    $region15: #{tpu_custom_call.1} parent=1 // pred_check_branch
      %34 = sbr.rel (0) target = $region17
    $region16: #{tpu_custom_call.1} parent=1 // pred_region
      %35 = dma.done [#allocation6], 128
    $region17: #{tpu_custom_call.1} parent=1 // pred_fallthru
      _
    %v36 = vld [vmem:[#allocation2] sm:$0xf]
    %v37 = vld [vmem:[#allocation5 + $0x1] sm:$0x1]
    %v38 = vld [vmem:[#allocation5 + $0x3] sm:$0x1]
    %v39 = vld [vmem:[#allocation5 + $0x4] sm:$0x1]
    %vm40 = vcmp.gt.f32.partialorder %v39, 0.5
    %v41 = vlaneseq
    %v42 = vshrl.u32 %v41, 7
    %v43 = vsub.s32 0, %v42
    %v44 = vrot.slane %v37, %v43
    %v45 = vsub.f32 %v36, %v44
    %v46 = vlaneseq
    %v47 = vshrl.u32 %v46, 7
    %v48 = vsub.s32 0, %v47
    %v49 = vrot.slane %v38, %v48
    %v50 = vmul.f32 %v45, %v49
    %v51 = vmax.f32 %v50, -10000.0
    %v52 = vmin.f32 %v51, 10000.0
    %v53 = vsel %vm40, 1, 0
    %v54 = vlaneseq
    %v55 = vshrl.u32 %v54, 7
    %v56 = vsub.s32 0, %v55
    %v57 = vrot.slane %v53, %v56
    %vm58 = vcmp.eq.s32.totalorder %v57, 1
    %v59 = vsel %vm58, %v52, %v45
    %60 = vst [vmem:[#allocation7] sm:$0xf] %v59
    // Predicated region
    $region18: #{tpu_custom_call.1} parent=1 // pred_check
      _
    $region19: #{tpu_custom_call.1} parent=1 // pred_check_branch
      %62 = sbr.rel (0) target = $region21
    $region20: #{tpu_custom_call.1} parent=1 // pred_region
      %s64 = ssub.s32 64, 64
      %65 = vsyncadd [#allocation4], %s64
      %s67 = sshll.u32 [#allocation7], 4
      %s68 = int_to_ptr.vmem [resolvable:$true] %s67
      %70 = dma.vmem_to_hbm [thread:$0]  %s68, 64, %s2, [#allocation4]
    $region21: #{tpu_custom_call.1} parent=1 // pred_fallthru
      _
    // Predicated region
    $region22: #{tpu_custom_call.1} parent=1 // pred_check
      _
    $region23: #{tpu_custom_call.1} parent=1 // pred_check_branch
      %72 = sbr.rel (0) target = $region25
    $region24: #{tpu_custom_call.1} parent=1 // pred_region
      %73 = dma.done [#allocation4], 64
    $region25: #{tpu_custom_call.1} parent=1 // pred_fallthru
      _
    %74 = vsyncpa [#allocation3], 1
    %75 = vsyncpa [#allocation6], 1
    %76 = vsyncpa [#allocation4], 1

</llo_original>
